<compile_context>
chip_gen: v6e
topology: v6e:2x2x1
jax: 0.10.0
libtpu: 0.0.40
codegen_flags: <defaults>
</compile_context>

<pallas_src>
import functools

import jax
import jax.numpy as jnp
from jax import lax
from jax.experimental import pallas as pl
from jax.experimental.pallas import tpu as pltpu


def _round_up(n, m):
    return ((n + m - 1) // m) * m


def _policy_kernel(x_ref, g_ref, w1_ref, w2_ref, w3_ref,
                   logp_ref, action_ref, nan_ref, *, action_dim):
    """Fused MLP (+folded biases) + log_softmax + Gumbel-max sample + NaN flag.

    x_ref:      (TB, Sp)  f32  padded state; column `state_dim` is 1.0 (bias column)
    g_ref:      (TB, Ap)  f32  Gumbel(0,1) noise
    w1_ref:     (Sp, Hp)  bf16 (row state_dim = b1; [state_dim, hidden_dim] = 1 bias lane)
    w2_ref:     (Hp, Hp)  bf16 (row hidden_dim = b2; [hidden_dim, hidden_dim] = 1 bias lane)
    w3_ref:     (Hp, Ap)  bf16 (row hidden_dim = b3)
    logp_ref:   (TB, Ap)  f32  log-probabilities (padded action cols ~ -1e30)
    action_ref: (TB, 1)   i32  sampled action per row
    nan_ref:    (1, 1)    i32  SMEM per-tile NaN flag
    """
    x = x_ref[...]
    wdt = w1_ref.dtype  # bf16 MXU operands; f32 accumulation.

    h1 = jnp.maximum(
        jnp.dot(x.astype(wdt), w1_ref[...], preferred_element_type=jnp.float32), 0.0)
    h2 = jnp.maximum(
        jnp.dot(h1.astype(wdt), w2_ref[...], preferred_element_type=jnp.float32), 0.0)
    logits = jnp.dot(h2.astype(wdt), w3_ref[...], preferred_element_type=jnp.float32)

    # Mask padded action columns so they never win the softmax / the sample.
    col = lax.broadcasted_iota(jnp.int32, logits.shape, 1)
    logits = jnp.where(col < action_dim, logits, -1e30)

    # Numerically stable log_softmax along the action axis (f32 elementwise -> v5e-safe).
    m = jnp.max(logits, axis=-1, keepdims=True)
    shifted = logits - m
    lse = jnp.log(jnp.sum(jnp.exp(shifted), axis=-1, keepdims=True))
    logp = shifted - lse
    logp_ref[...] = logp

    # Fused categorical sample via Gumbel-max (noise supplied from the wrapper).
    scores = logp + g_ref[...]
    best = jnp.max(scores, axis=-1, keepdims=True)
    action = jnp.min(jnp.where(scores == best, col, logits.shape[-1]),
                     axis=-1, keepdims=True)
    # If a row contained NaN no column compares equal; clamp into range (callers gate on nan_flag).
    action = jnp.minimum(action, action_dim - 1)
    action_ref[...] = action.astype(jnp.int32)

    # Tile-level NaN flag fully reduced in-kernel to a single SMEM scalar.
    nan_ref[0, 0] = jnp.max(jnp.where(jnp.isnan(logp), 1, 0)).astype(jnp.int32)


def init_params(key, state_dim, action_dim, hidden_dim=128):
    """PyTorch-style nn.Linear init: uniform(-1/sqrt(fan_in), 1/sqrt(fan_in)).

    Weights stored as (in_features, out_features), float32.
    """
    keys = jax.random.split(key, 6)

    def lin(kw, kb, fan_in, fan_out):
        bound = 1.0 / jnp.sqrt(fan_in)
        w = jax.random.uniform(kw, (fan_in, fan_out), jnp.float32, -bound, bound)
        b = jax.random.uniform(kb, (fan_out,), jnp.float32, -bound, bound)
        return w, b

    w1, b1 = lin(keys[0], keys[1], state_dim, hidden_dim)
    w2, b2 = lin(keys[2], keys[3], hidden_dim, hidden_dim)
    w3, b3 = lin(keys[4], keys[5], hidden_dim, action_dim)
    return (w1, b1, w2, b2, w3, b3)


def prepare_params(params, param_dtype=jnp.bfloat16):
    """One-time pad + bias folding + bf16 cast (hoisted out of the per-call path).

    Biases are folded into the matmuls:
      * x gets a ones column at index state_dim; w1 row state_dim holds b1.
      * hidden lane index hidden_dim is the bias-propagation lane (always 1 after relu);
        w2/w3 row hidden_dim hold b2/b3.
    Note: when hidden_dim is an exact multiple of 128 the bias lane rounds Hp up by one
    extra 128-lane tile; at these sizes (<=256) the extra MXU/DMA cost is negligible.
    """
    w1, b1, w2, b2, w3, b3 = params
    S, H = w1.shape
    A = w3.shape[1]

    Sp = _round_up(S + 1, 16)     # contraction dim only needs sublane alignment
    Hp = _round_up(H + 1, 128)
    Ap = _round_up(A, 128)

    w1_p = jnp.zeros((Sp, Hp), jnp.float32)
    w1_p = w1_p.at[:S, :H].set(w1)
    w1_p = w1_p.at[S, :H].set(b1)
    w1_p = w1_p.at[S, H].set(1.0)          # feed the bias lane

    w2_p = jnp.zeros((Hp, Hp), jnp.float32)
    w2_p = w2_p.at[:H, :H].set(w2)
    w2_p = w2_p.at[H, :H].set(b2)
    w2_p = w2_p.at[H, H].set(1.0)          # propagate the bias lane

    w3_p = jnp.zeros((Hp, Ap), jnp.float32)
    w3_p = w3_p.at[:H, :A].set(w3)
    w3_p = w3_p.at[H, :A].set(b3)

    return (w1_p.astype(param_dtype), w2_p.astype(param_dtype), w3_p.astype(param_dtype))


@functools.partial(jax.jit, static_argnames=("action_dim",))
def policy_network_forward(x, rng_key, prepared, *, action_dim):
    """Runs the fused Pallas kernel.

    x:        (B, state_dim) float32
    rng_key:  jax PRNG key (must differ per step for fresh samples)
    prepared: output of prepare_params()

    Returns (actions (B,) int32, log_probs (B, action_dim) f32, nan_flag scalar int32).
    """
    w1_p, w2_p, w3_p = prepared
    B, S = x.shape
    Sp, Hp = w1_p.shape
    Ap = w3_p.shape[1]

    # Batch tiling: one tile for small B; 256-row tiles sharded across cores for large B.
    TB = _round_up(B, 16) if B <= 256 else 256
    Bp = _round_up(B, TB)
    nbt = Bp // TB

    # Per-call data movement: append the bias-ones column and pad in one op.
    x_aug = jnp.concatenate([x.astype(jnp.float32), jnp.ones((B, 1), jnp.float32)], axis=1)
    x_p = jnp.pad(x_aug, ((0, Bp - B), (0, Sp - (S + 1))))

    # Gumbel noise for the in-kernel categorical sample.
    # TODO(synk): use the TPU hardware PRNG (pltpu.prng_seed/prng_random_bits) when not
    # running under the interpreter; those primitives have no CPU/interpret lowering.
    gumbel = jax.random.gumbel(rng_key, (Bp, Ap), jnp.float32)

    kernel = functools.partial(_policy_kernel, action_dim=action_dim)

    in_specs = [
        pl.BlockSpec((TB, Sp), lambda i: (i, 0)),   # x (padded, bias column appended)
        pl.BlockSpec((TB, Ap), lambda i: (i, 0)),   # gumbel noise
        pl.BlockSpec((Sp, Hp), lambda i: (0, 0)),   # w1 (VMEM-resident across tiles)
        pl.BlockSpec((Hp, Hp), lambda i: (0, 0)),   # w2
        pl.BlockSpec((Hp, Ap), lambda i: (0, 0)),   # w3
    ]
    out_specs = (
        pl.BlockSpec((TB, Ap), lambda i: (i, 0)),   # log-probs (lane-dense, padded)
        pl.BlockSpec((TB, 1), lambda i: (i, 0)),    # sampled action per row
        pl.BlockSpec((1, 1), lambda i: (i, 0),      # per-tile NaN flag (SMEM scalar)
                     memory_space=pltpu.MemorySpace.SMEM),
    )
    out_shapes = (
        jax.ShapeDtypeStruct((Bp, Ap), jnp.float32),
        jax.ShapeDtypeStruct((Bp, 1), jnp.int32),
        jax.ShapeDtypeStruct((nbt, 1), jnp.int32),
    )

    logp_pad, action_col, nan_tiles = pl.pallas_call(
        kernel,
        out_shape=out_shapes,
        grid=(nbt,),
        in_specs=in_specs,
        out_specs=out_specs,
        compiler_params=pltpu.CompilerParams(dimension_semantics=("parallel",)),
    )(x_p, gumbel, w1_p, w2_p, w3_p)

    # TODO(synk): callers that can consume the padded buffers directly should skip these slices
    # (each is an extra tiny XLA op in an RL step loop).
    log_probs = logp_pad[:B, :action_dim]
    actions = action_col[:B, 0]
    nan_flag = jnp.max(nan_tiles)
    return actions, log_probs, nan_flag


def reference_forward(x, params):
    """Pure-JAX reference mirroring the kernel's precision path (bf16 MXU operands + bf16
    folded biases, f32 accumulation / elementwise)."""
    w1, b1, w2, b2, w3, b3 = params
    bf = lambda a: a.astype(jnp.bfloat16).astype(jnp.float32)
    dot = functools.partial(jnp.dot, precision=lax.Precision.HIGHEST)
    h = jnp.maximum(dot(bf(x), bf(w1)) + bf(b1), 0.0)
    h = jnp.maximum(dot(bf(h), bf(w2)) + bf(b2), 0.0)
    logits = dot(bf(h), bf(w3)) + bf(b3)
    return jax.nn.log_softmax(logits, axis=-1)


if __name__ == "__main__":
    state_dim = 4
    action_dim = 2
    hidden_dim = 32
    batch = 1  # PyTorch forward ends with .item(): single state -> single action

    key = jax.random.PRNGKey(0)
    k_params, k_x, k_sample = jax.random.split(key, 3)

    params = init_params(k_params, state_dim, action_dim, hidden_dim)
    prepared = prepare_params(params, param_dtype=jnp.bfloat16)  # one-time pad/fold/cast
    x = jax.random.normal(k_x, (batch, state_dim), jnp.float32)

    actions, action_log_probs, nan_flag = policy_network_forward(
        x, k_sample, prepared, action_dim=action_dim)
    jax.block_until_ready((actions, action_log_probs, nan_flag))

    # _check_for_nan equivalent (flag computed in-kernel; single host readback).
    # TODO(synk): the RuntimeError raise / int(action) host sync are inherently host-side;
    # in a real RL loop check the flag asynchronously / periodically instead of every step.
    if int(nan_flag) != 0:
        raise RuntimeError(
            "The policy network returned nan values, this could be because of a "
            "gradient explosion. Consider lowering the policy learning rate."
        )

    # Categorical(logits=log_probs).sample().item() — sampled inside the kernel (Gumbel-max).
    action = int(actions[0])

    # Validate against pure-JAX reference.
    ref = reference_forward(x, params)
    assert not bool(jnp.isnan(ref).any())
    assert jnp.allclose(action_log_probs, ref, atol=1e-3, rtol=1e-3), (action_log_probs, ref)
    assert 0 <= action < action_dim

    print("KERNEL_OK")
</pallas_src>

<mosaic_0001>
module attributes {stable_mosaic.version = 11 : i64} {
  func.func @_policy_kernel(%arg0: i32, %arg1: memref<16x16xf32, #tpu.memory_space<vmem>>, %arg2: memref<16x128xf32, #tpu.memory_space<vmem>>, %arg3: memref<16x128xbf16, #tpu.memory_space<vmem>>, %arg4: memref<128x128xbf16, #tpu.memory_space<vmem>>, %arg5: memref<128x128xbf16, #tpu.memory_space<vmem>>, %arg6: memref<16x128xf32, #tpu.memory_space<vmem>>, %arg7: memref<16x1xi32, #tpu.memory_space<vmem>>, %arg8: memref<1x1xi32, #tpu.memory_space<smem>>) attributes {dimension_semantics = [#tpu.dimension_semantics<parallel>], iteration_bounds = array<i64: 1>, scalar_prefetch = 0 : i64, scratch_operands = 0 : i64, tpu.core_type = #tpu.core_type<tc>, window_params = [{transform_indices = @transform_0, window_bounds = array<i64: 16, 16>}, {transform_indices = @transform_1, window_bounds = array<i64: 16, 128>}, {pipeline_mode = #tpu.pipeline_mode<synchronous>, transform_indices = @transform_2, window_bounds = array<i64: 16, 128>}, {pipeline_mode = #tpu.pipeline_mode<synchronous>, transform_indices = @transform_3, window_bounds = array<i64: 128, 128>}, {pipeline_mode = #tpu.pipeline_mode<synchronous>, transform_indices = @transform_4, window_bounds = array<i64: 128, 128>}, {transform_indices = @transform_5, window_bounds = array<i64: 16, 128>}, {transform_indices = @transform_6, window_bounds = array<i64: 16, 1>}, {transform_indices = @transform_7, window_bounds = array<i64: 1, 1>}]} {
    %c0 = arith.constant 0 : index
    %c0_0 = arith.constant 0 : index
    %0 = vector.load %arg1[%c0, %c0_0] : memref<16x16xf32, #tpu.memory_space<vmem>>, vector<16x16xf32>
    %1 = arith.truncf %0 : vector<16x16xf32> to vector<16x16xbf16>
    %c0_1 = arith.constant 0 : index
    %c0_2 = arith.constant 0 : index
    %2 = vector.load %arg3[%c0_1, %c0_2] : memref<16x128xbf16, #tpu.memory_space<vmem>>, vector<16x128xbf16>
    %cst = arith.constant dense<0.000000e+00> : vector<16x128xf32>
    %3 = tpu.matmul %1, %2, %cst {dimension_numbers = #tpu.dot_dimension_numbers<[1], [0], [0], [1], [0, 0, 1, 1], [], []>} : vector<16x16xbf16>, vector<16x128xbf16>, vector<16x128xf32> -> vector<16x128xf32>
    %cst_3 = arith.constant 0.000000e+00 : f32
    %4 = vector.broadcast %cst_3 : f32 to vector<16x128xf32>
    %5 = arith.maximumf %3, %4 : vector<16x128xf32>
    %6 = arith.truncf %5 : vector<16x128xf32> to vector<16x128xbf16>
    %c0_4 = arith.constant 0 : index
    %c0_5 = arith.constant 0 : index
    %7 = vector.load %arg4[%c0_4, %c0_5] : memref<128x128xbf16, #tpu.memory_space<vmem>>, vector<128x128xbf16>
    %cst_6 = arith.constant dense<0.000000e+00> : vector<16x128xf32>
    %8 = tpu.matmul %6, %7, %cst_6 {dimension_numbers = #tpu.dot_dimension_numbers<[1], [0], [0], [1], [0, 0, 1, 1], [], []>} : vector<16x128xbf16>, vector<128x128xbf16>, vector<16x128xf32> -> vector<16x128xf32>
    %cst_7 = arith.constant 0.000000e+00 : f32
    %9 = vector.broadcast %cst_7 : f32 to vector<16x128xf32>
    %10 = arith.maximumf %8, %9 : vector<16x128xf32>
    %11 = arith.truncf %10 : vector<16x128xf32> to vector<16x128xbf16>
    %c0_8 = arith.constant 0 : index
    %c0_9 = arith.constant 0 : index
    %12 = vector.load %arg5[%c0_8, %c0_9] : memref<128x128xbf16, #tpu.memory_space<vmem>>, vector<128x128xbf16>
    %cst_10 = arith.constant dense<0.000000e+00> : vector<16x128xf32>
    %13 = tpu.matmul %11, %12, %cst_10 {dimension_numbers = #tpu.dot_dimension_numbers<[1], [0], [0], [1], [0, 0, 1, 1], [], []>} : vector<16x128xbf16>, vector<128x128xbf16>, vector<16x128xf32> -> vector<16x128xf32>
    %14 = tpu.iota {dimensions = array<i32: 1>} : vector<16x128xi32>
    %c2_i32 = arith.constant 2 : i32
    %15 = vector.broadcast %c2_i32 : i32 to vector<16x128xi32>
    %16 = arith.cmpi slt, %14, %15 : vector<16x128xi32>
    %cst_11 = arith.constant -1.000000e+30 : f32
    %17 = vector.broadcast %cst_11 : f32 to vector<16x128xf32>
    %18 = arith.select %16, %13, %17 : vector<16x128xi1>, vector<16x128xf32>
    %cst_12 = arith.constant dense<0xFF800000> : vector<16xf32>
    %19 = vector.multi_reduction <maximumf>, %18, %cst_12 [1] : vector<16x128xf32> to vector<16xf32>
    %20 = vector.shape_cast %19 : vector<16xf32> to vector<16x1xf32>
    %21 = vector.broadcast %20 : vector<16x1xf32> to vector<16x128xf32>
    %22 = arith.subf %18, %21 : vector<16x128xf32>
    %23 = math.exp %22 : vector<16x128xf32>
    %cst_13 = arith.constant dense<0.000000e+00> : vector<16xf32>
    %24 = vector.multi_reduction <add>, %23, %cst_13 [1] : vector<16x128xf32> to vector<16xf32>
    %25 = vector.shape_cast %24 : vector<16xf32> to vector<16x1xf32>
    %26 = math.log %25 : vector<16x1xf32>
    %27 = vector.broadcast %26 : vector<16x1xf32> to vector<16x128xf32>
    %28 = arith.subf %22, %27 : vector<16x128xf32>
    %c0_14 = arith.constant 0 : index
    %c0_15 = arith.constant 0 : index
    %29 = vector.load %arg6[%c0_14, %c0_15] : memref<16x128xf32, #tpu.memory_space<vmem>>, vector<16x128xf32>
    tpu.vector_store %arg6[%c0_14, %c0_15], %28 {strides = array<i32>} : memref<16x128xf32, #tpu.memory_space<vmem>>, vector<16x128xf32>,
    %c0_16 = arith.constant 0 : index
    %c0_17 = arith.constant 0 : index
    %30 = vector.load %arg2[%c0_16, %c0_17] : memref<16x128xf32, #tpu.memory_space<vmem>>, vector<16x128xf32>
    %31 = arith.addf %28, %30 : vector<16x128xf32>
    %cst_18 = arith.constant dense<0xFF800000> : vector<16xf32>
    %32 = vector.multi_reduction <maximumf>, %31, %cst_18 [1] : vector<16x128xf32> to vector<16xf32>
    %33 = vector.shape_cast %32 : vector<16xf32> to vector<16x1xf32>
    %34 = vector.broadcast %33 : vector<16x1xf32> to vector<16x128xf32>
    %35 = arith.cmpf oeq, %31, %34 : vector<16x128xf32>
    %c128_i32 = arith.constant 128 : i32
    %36 = vector.broadcast %c128_i32 : i32 to vector<16x128xi32>
    %37 = arith.select %35, %14, %36 : vector<16x128xi1>, vector<16x128xi32>
    %cst_19 = arith.constant dense<2147483647> : vector<16xi32>
    %38 = vector.multi_reduction <minsi>, %37, %cst_19 [1] : vector<16x128xi32> to vector<16xi32>
    %39 = vector.shape_cast %38 : vector<16xi32> to vector<16x1xi32>
    %c1_i32 = arith.constant 1 : i32
    %40 = vector.broadcast %c1_i32 : i32 to vector<16x1xi32>
    %41 = arith.minsi %39, %40 : vector<16x1xi32>
    %c0_20 = arith.constant 0 : index
    %c0_21 = arith.constant 0 : index
    %42 = vector.load %arg7[%c0_20, %c0_21] : memref<16x1xi32, #tpu.memory_space<vmem>>, vector<16x1xi32>
    tpu.vector_store %arg7[%c0_20, %c0_21], %41 {strides = array<i32>} : memref<16x1xi32, #tpu.memory_space<vmem>>, vector<16x1xi32>,
    %43 = arith.cmpf one, %28, %28 : vector<16x128xf32>
    %c1_i32_22 = arith.constant 1 : i32
    %c0_i32 = arith.constant 0 : i32
    %44 = vector.broadcast %c1_i32_22 : i32 to vector<16x128xi32>
    %45 = vector.broadcast %c0_i32 : i32 to vector<16x128xi32>
    %46 = arith.select %43, %44, %45 : vector<16x128xi1>, vector<16x128xi32>
    %47 = vector.shape_cast %46 : vector<16x128xi32> to vector<1x16x128xi32>
    %cst_23 = arith.constant dense<-2147483648> : vector<1xi32>
    %48 = vector.multi_reduction <maxsi>, %47, %cst_23 [1, 2] : vector<1x16x128xi32> to vector<1xi32>
    %49 = vector.shape_cast %48 : vector<1xi32> to vector<1x1x1xi32>
    %50 = vector.extract %49[0, 0, 0] : i32 from vector<1x1x1xi32>
    %c0_24 = arith.constant 0 : index
    %c0_25 = arith.constant 0 : index
    %51 = memref.load %arg8[%c0_24, %c0_25] : memref<1x1xi32, #tpu.memory_space<smem>>
    memref.store %50, %arg8[%c0_24, %c0_25] : memref<1x1xi32, #tpu.memory_space<smem>>
    return
  }
  func.func @transform_0(%arg0: i32) -> (i32, i32) {
    %c0_i32 = arith.constant 0 : i32
    %c0_i32_0 = arith.constant 0 : i32
    return %arg0, %c0_i32 : i32, i32
  }
  func.func @transform_1(%arg0: i32) -> (i32, i32) {
    %c0_i32 = arith.constant 0 : i32
    %c0_i32_0 = arith.constant 0 : i32
    return %arg0, %c0_i32 : i32, i32
  }
  func.func @transform_2(%arg0: i32) -> (i32, i32) {
    %c0_i32 = arith.constant 0 : i32
    %c0_i32_0 = arith.constant 0 : i32
    %c0_i32_1 = arith.constant 0 : i32
    return %c0_i32, %c0_i32_0 : i32, i32
  }
  func.func @transform_3(%arg0: i32) -> (i32, i32) {
    %c0_i32 = arith.constant 0 : i32
    %c0_i32_0 = arith.constant 0 : i32
    %c0_i32_1 = arith.constant 0 : i32
    return %c0_i32, %c0_i32_0 : i32, i32
  }
  func.func @transform_4(%arg0: i32) -> (i32, i32) {
    %c0_i32 = arith.constant 0 : i32
    %c0_i32_0 = arith.constant 0 : i32
    %c0_i32_1 = arith.constant 0 : i32
    return %c0_i32, %c0_i32_0 : i32, i32
  }
  func.func @transform_5(%arg0: i32) -> (i32, i32) {
    %c0_i32 = arith.constant 0 : i32
    %c0_i32_0 = arith.constant 0 : i32
    return %arg0, %c0_i32 : i32, i32
  }
  func.func @transform_6(%arg0: i32) -> (i32, i32) {
    %c0_i32 = arith.constant 0 : i32
    %c0_i32_0 = arith.constant 0 : i32
    return %arg0, %c0_i32 : i32, i32
  }
  func.func @transform_7(%arg0: i32) -> (i32, i32) {
    %c0_i32 = arith.constant 0 : i32
    %c0_i32_0 = arith.constant 0 : i32
    return %arg0, %c0_i32 : i32, i32
  }
}

</mosaic_0001>

<llo_original>
// kernel: policy_network_forward.1
$region0: #{policy_network_forward.1}
  #allocation0 [shape = 'u32[]', space=smem, size = 0x4, offset = 0x4, fixed_abs, tag = 'smem constant byte address 0x4 - core index']
  #allocation1 [shape = 'u32[144,128]{1,0:T(1,128)}', space=vmem, size = 0x12000, scoped, tag = 'internal scratch']
  %s0 = inlined_call_operand.vmem [shape: f32[16,16], index: 0, kind: input, shape index: {}]
  %s1 = inlined_call_operand.vmem [shape: f32[16,128], index: 1, kind: input, shape index: {}]
  %s2 = inlined_call_operand.hbm [shape: bf16[16,128], index: 2, kind: input, shape index: {}]
  %s3 = inlined_call_operand.vmem [shape: bf16[128,128], index: 3, kind: input, shape index: {}]
  %s4 = inlined_call_operand.hbm [shape: bf16[128,128], index: 4, kind: input, shape index: {}]
  %s5 = inlined_call_operand.vmem [shape: f32[16,128], index: 5, kind: output, shape index: {0}]
  %s6 = inlined_call_operand.vmem [shape: s32[16,1], index: 6, kind: output, shape index: {1}]
  %s7 = inlined_call_operand.hbm [shape: s32[1,1], index: 7, kind: output, shape index: {2}]
  %8 = xla_tuple %s5, %s6, %s7
  %s9 = sld [smem:[#allocation0]]
  $region54: #{policy_network_forward.1} parent=0
    _
  %s11 = ssub.s32 1, %s9
  %s12 = scalar_select 0, %s11, %s9
  $region1: #{policy_network_forward.1} parent=0
    #allocation2 [shape = 'u8[4096]{0}', space=vmem, size = 0x1000, scoped, tag = 'input window, operand 2, single buffered']
    #allocation3 [shape = 's32[1]{0}', space=sflag, size = 0x4, scoped, tag = 'scoped memory for policy_network_forward.1']
    #allocation4 [shape = 's32[1]{0}', space=sflag, size = 0x4, scoped, tag = 'scoped memory for policy_network_forward.1']
    #allocation5 [shape = 'u8[32768]{0}', space=vmem, size = 0x8000, scoped, tag = 'input window, operand 4, single buffered']
    #allocation6 [shape = 's32[1]{0}', space=sflag, size = 0x4, scoped, tag = 'scoped memory for policy_network_forward.1']
    #allocation7 [shape = 'u8[512]{0}', space=smem, size = 0x200, scoped, tag = 'output window, operand 2, single buffered']
    %13 = vsyncpa [#allocation3], 0
    %14 = vsyncpa [#allocation6], 0
    %15 = vsyncpa [#allocation4], 0
    // Predicated region
    $region2: #{policy_network_forward.1} parent=1 // pred_check
      _
    $region3: #{policy_network_forward.1} parent=1 // pred_check_branch
      %17 = sbr.rel (0) target = $region5
    $region4: #{policy_network_forward.1} parent=1 // pred_region
      _
    $region5: #{policy_network_forward.1} parent=1 // pred_fallthru
      _
    // Predicated region
    $region6: #{policy_network_forward.1} parent=1 // pred_check
      _
    $region7: #{policy_network_forward.1} parent=1 // pred_check_branch
      %19 = sbr.rel (0) target = $region9
    $region8: #{policy_network_forward.1} parent=1 // pred_region
      _
    $region9: #{policy_network_forward.1} parent=1 // pred_fallthru
      _
    // Predicated region
    $region10: #{policy_network_forward.1} parent=1 // pred_check
      _
    $region11: #{policy_network_forward.1} parent=1 // pred_check_branch
      %21 = sbr.rel (0) target = $region13
    $region12: #{policy_network_forward.1} parent=1 // pred_region
      %s23 = ssub.s32 128, 128
      %24 = vsyncadd [#allocation3], %s23
      %s25 = sshll.u32 [#allocation2], 4
      %s26 = int_to_ptr.vmem [resolvable:$true] %s25
      %31 = dma.hbm_to_vmem [thread:$0]  %s2, 128, %s26, [#allocation3], 64, 64, 4
    $region13: #{policy_network_forward.1} parent=1 // pred_fallthru
      _
    // Predicated region
    $region14: #{policy_network_forward.1} parent=1 // pred_check
      _
    $region15: #{policy_network_forward.1} parent=1 // pred_check_branch
      %33 = sbr.rel (0) target = $region17
    $region16: #{policy_network_forward.1} parent=1 // pred_region
      _
    $region17: #{policy_network_forward.1} parent=1 // pred_fallthru
      _
    // Predicated region
    $region18: #{policy_network_forward.1} parent=1 // pred_check
      _
    $region19: #{policy_network_forward.1} parent=1 // pred_check_branch
      %35 = sbr.rel (0) target = $region21
    $region20: #{policy_network_forward.1} parent=1 // pred_region
      %s37 = ssub.s32 1024, 1024
      %38 = vsyncadd [#allocation6], %s37
      %s39 = sshll.u32 [#allocation5], 4
      %s40 = int_to_ptr.vmem [resolvable:$true] %s39
      %45 = dma.hbm_to_vmem [thread:$0]  %s4, 1024, %s40, [#allocation6], 64, 64, 4
    $region21: #{policy_network_forward.1} parent=1 // pred_fallthru
      _
    // Predicated region
    $region22: #{policy_network_forward.1} parent=1 // pred_check
      _
    $region23: #{policy_network_forward.1} parent=1 // pred_check_branch
      %47 = sbr.rel (0) target = $region25
    $region24: #{policy_network_forward.1} parent=1 // pred_region
      %48 = dma.done [#allocation3], 128
    $region25: #{policy_network_forward.1} parent=1 // pred_fallthru
      _
    // Predicated region
    $region26: #{policy_network_forward.1} parent=1 // pred_check
      _
    $region27: #{policy_network_forward.1} parent=1 // pred_check_branch
      %50 = sbr.rel (0) target = $region29
    $region28: #{policy_network_forward.1} parent=1 // pred_region
      %51 = dma.done [#allocation6], 1024
    $region29: #{policy_network_forward.1} parent=1 // pred_fallthru
      _
    %v53 = vld [vmem:[%s0] sm:$0xff]
    %v54 = vld [vmem:[%s0 + $0x8] sm:$0xff]
    %v55 = vpack.c.bf16 %v54, %v53
    %v56 = vld [vmem:[#allocation2] sm:$0xf]
    %v57 = vld [vmem:[#allocation2 + $0x4] sm:$0xf]
    %v60 = vunpack.c.l.b16 %v56
    %v61 = vunpack.c.l.b16 %v57
    %v62 = vpack.c.b16 %v61, %v60
    %vm64 = vcmask 130048
    %v66 = vsel %vm64, %v55, 0
    %68 = vmatprep.subr.bf16.mxu0 0
    %69 = vmatpush1.bf16.msra.mxu0 0
    %70 = vmatprep.subr.bf16.mxu0 0
    %71 = vmatpush1.bf16.msra.mxu0 0
    %72 = vmatprep.subr.bf16.mxu0 0
    %73 = vmatpush1.bf16.msra.mxu0 0
    %74 = vmatprep.subr.bf16.mxu0 0
    %75 = vmatpush1.bf16.msra.mxu0 0
    %76 = vmatprep.subr.bf16.mxu0 0
    %77 = vmatpush1.bf16.msra.mxu0 0
    %78 = vmatprep.subr.bf16.mxu0 0
    %79 = vmatpush1.bf16.msra.mxu0 0
    %80 = vmatprep.subr.bf16.mxu0 0
    %81 = vmatpush1.bf16.msra.mxu0 0
    %82 = vmatprep.subr.bf16.mxu0 0
    %83 = vmatpush1.bf16.msra.mxu0 %v62
    %84 = vmatprep.subr.bf16.mxu0 0
    %85 = vmatpush2.bf16.msra.mxu0 0
    %86 = vmatprep.subr.bf16.mxu0 0
    %87 = vmatpush2.bf16.msra.mxu0 0
    %88 = vmatprep.subr.bf16.mxu0 0
    %89 = vmatpush2.bf16.msra.mxu0 0
    %90 = vmatprep.subr.bf16.mxu0 0
    %91 = vmatpush2.bf16.msra.mxu0 0
    %92 = vmatprep.subr.bf16.mxu0 0
    %93 = vmatpush2.bf16.msra.mxu0 0
    %94 = vmatprep.subr.bf16.mxu0 0
    %95 = vmatpush2.bf16.msra.mxu0 0
    %96 = vmatprep.subr.bf16.mxu0 0
    %97 = vmatpush2.bf16.msra.mxu0 0
    %98 = vmatprep.subr.bf16.mxu0 0
    %99 = vmatpush2.bf16.msra.mxu0 0
    %100 = vmatprep.mubr.bf16.mxu0 0
    %101 = vmatmul.mubr.bf16.gmra.mxu0 %v66
    %v102 = vpop.f32.mrf.mxu0
    %v103 = vadd.f32 0.0, %v102
    %v104 = vpop.f32.mrf.mxu0
    %v105 = vpop.f32.mrf.mxu0
    %v106 = vadd.f32 0.0, %v105
    %v107 = vpop.f32.mrf.mxu0
    %108 = vdwg.mxu0
    %v109 = vmax.f32 %v103, 0.0
    %v110 = vmax.f32 %v106, 0.0
    %v111 = vpack.c.bf16 %v110, %v109
    %v112 = vld [vmem:[%s3] sm:$0xf]
    %v113 = vld [vmem:[%s3 + $0x4] sm:$0xf]
    %v114 = vld [vmem:[%s3 + $0x8] sm:$0xf]
    %v115 = vld [vmem:[%s3 + $0xc] sm:$0xf]
    %v116 = vld [vmem:[%s3 + $0x10] sm:$0xf]
    %v117 = vld [vmem:[%s3 + $0x14] sm:$0xf]
    %v118 = vld [vmem:[%s3 + $0x18] sm:$0xf]
    %v119 = vld [vmem:[%s3 + $0x1c] sm:$0xf]
    %v120 = vld [vmem:[%s3 + $0x20] sm:$0xf]
    %v121 = vld [vmem:[%s3 + $0x24] sm:$0xf]
    %v122 = vld [vmem:[%s3 + $0x28] sm:$0xf]
    %v123 = vld [vmem:[%s3 + $0x2c] sm:$0xf]
    %v124 = vld [vmem:[%s3 + $0x30] sm:$0xf]
    %v125 = vld [vmem:[%s3 + $0x34] sm:$0xf]
    %v126 = vld [vmem:[%s3 + $0x38] sm:$0xf]
    %v127 = vld [vmem:[%s3 + $0x3c] sm:$0xf]
    %v144 = vunpack.c.l.b16 %v112
    %v145 = vunpack.c.l.b16 %v113
    %v146 = vunpack.c.l.b16 %v114
    %v147 = vunpack.c.l.b16 %v115
    %v148 = vunpack.c.l.b16 %v116
    %v149 = vunpack.c.l.b16 %v117
    %v150 = vunpack.c.l.b16 %v118
    %v151 = vunpack.c.l.b16 %v119
    %v152 = vunpack.c.l.b16 %v120
    %v153 = vunpack.c.l.b16 %v121
    %v154 = vunpack.c.l.b16 %v122
    %v155 = vunpack.c.l.b16 %v123
    %v156 = vunpack.c.l.b16 %v124
    %v157 = vunpack.c.l.b16 %v125
    %v158 = vunpack.c.l.b16 %v126
    %v159 = vunpack.c.l.b16 %v127
    %v160 = vpack.c.b16 %v145, %v144
    %v161 = vpack.c.b16 %v147, %v146
    %v162 = vpack.c.b16 %v149, %v148
    %v163 = vpack.c.b16 %v151, %v150
    %v164 = vpack.c.b16 %v153, %v152
    %v165 = vpack.c.b16 %v155, %v154
    %v166 = vpack.c.b16 %v157, %v156
    %v167 = vpack.c.b16 %v159, %v158
    %176 = vmatprep.subr.bf16.mxu0 0
    %177 = vmatpush1.bf16.msra.mxu0 %v167
    %178 = vmatprep.subr.bf16.mxu0 0
    %179 = vmatpush1.bf16.msra.mxu0 %v166
    %180 = vmatprep.subr.bf16.mxu0 0
    %181 = vmatpush1.bf16.msra.mxu0 %v165
    %182 = vmatprep.subr.bf16.mxu0 0
    %183 = vmatpush1.bf16.msra.mxu0 %v164
    %184 = vmatprep.subr.bf16.mxu0 0
    %185 = vmatpush1.bf16.msra.mxu0 %v163
    %186 = vmatprep.subr.bf16.mxu0 0
    %187 = vmatpush1.bf16.msra.mxu0 %v162
    %188 = vmatprep.subr.bf16.mxu0 0
    %189 = vmatpush1.bf16.msra.mxu0 %v161
    %190 = vmatprep.subr.bf16.mxu0 0
    %191 = vmatpush1.bf16.msra.mxu0 %v160
    %192 = vmatprep.subr.bf16.mxu0 0
    %193 = vmatpush2.bf16.msra.mxu0 0
    %194 = vmatprep.subr.bf16.mxu0 0
    %195 = vmatpush2.bf16.msra.mxu0 0
    %196 = vmatprep.subr.bf16.mxu0 0
    %197 = vmatpush2.bf16.msra.mxu0 0
    %198 = vmatprep.subr.bf16.mxu0 0
    %199 = vmatpush2.bf16.msra.mxu0 0
    %200 = vmatprep.subr.bf16.mxu0 0
    %201 = vmatpush2.bf16.msra.mxu0 0
    %202 = vmatprep.subr.bf16.mxu0 0
    %203 = vmatpush2.bf16.msra.mxu0 0
    %204 = vmatprep.subr.bf16.mxu0 0
    %205 = vmatpush2.bf16.msra.mxu0 0
    %206 = vmatprep.subr.bf16.mxu0 0
    %207 = vmatpush2.bf16.msra.mxu0 0
    %208 = vmatprep.mubr.bf16.mxu0 0
    %209 = vmatmul.mubr.bf16.gmra.mxu0 %v111
    %v210 = vpop.f32.mrf.mxu0
    %v211 = vadd.f32 0.0, %v210
    %v212 = vpop.f32.mrf.mxu0
    %v213 = vpop.f32.mrf.mxu0
    %v214 = vadd.f32 0.0, %v213
    %v215 = vpop.f32.mrf.mxu0
    %216 = vdwg.mxu0
    %v217 = vmax.f32 %v211, 0.0
    %v218 = vmax.f32 %v214, 0.0
    %v219 = vpack.c.bf16 %v218, %v217
    %v220 = vld [vmem:[#allocation5] sm:$0xf]
    %v221 = vld [vmem:[#allocation5 + $0x4] sm:$0xf]
    %v222 = vld [vmem:[#allocation5 + $0x8] sm:$0xf]
    %v223 = vld [vmem:[#allocation5 + $0xc] sm:$0xf]
    %v224 = vld [vmem:[#allocation5 + $0x10] sm:$0xf]
    %v225 = vld [vmem:[#allocation5 + $0x14] sm:$0xf]
    %v226 = vld [vmem:[#allocation5 + $0x18] sm:$0xf]
    %v227 = vld [vmem:[#allocation5 + $0x1c] sm:$0xf]
    %v228 = vld [vmem:[#allocation5 + $0x20] sm:$0xf]
    %v229 = vld [vmem:[#allocation5 + $0x24] sm:$0xf]
    %v230 = vld [vmem:[#allocation5 + $0x28] sm:$0xf]
    %v231 = vld [vmem:[#allocation5 + $0x2c] sm:$0xf]
    %v232 = vld [vmem:[#allocation5 + $0x30] sm:$0xf]
    %v233 = vld [vmem:[#allocation5 + $0x34] sm:$0xf]
    %v234 = vld [vmem:[#allocation5 + $0x38] sm:$0xf]
    %v235 = vld [vmem:[#allocation5 + $0x3c] sm:$0xf]
    %v252 = vunpack.c.l.b16 %v220
    %v253 = vunpack.c.l.b16 %v221
    %v254 = vunpack.c.l.b16 %v222
    %v255 = vunpack.c.l.b16 %v223
    %v256 = vunpack.c.l.b16 %v224
    %v257 = vunpack.c.l.b16 %v225
    %v258 = vunpack.c.l.b16 %v226
    %v259 = vunpack.c.l.b16 %v227
    %v260 = vunpack.c.l.b16 %v228
    %v261 = vunpack.c.l.b16 %v229
    %v262 = vunpack.c.l.b16 %v230
    %v263 = vunpack.c.l.b16 %v231
    %v264 = vunpack.c.l.b16 %v232
    %v265 = vunpack.c.l.b16 %v233
    %v266 = vunpack.c.l.b16 %v234
    %v267 = vunpack.c.l.b16 %v235
    %v268 = vpack.c.b16 %v253, %v252
    %v269 = vpack.c.b16 %v255, %v254
    %v270 = vpack.c.b16 %v257, %v256
    %v271 = vpack.c.b16 %v259, %v258
    %v272 = vpack.c.b16 %v261, %v260
    %v273 = vpack.c.b16 %v263, %v262
    %v274 = vpack.c.b16 %v265, %v264
    %v275 = vpack.c.b16 %v267, %v266
    %284 = vmatprep.subr.bf16.mxu0 0
    %285 = vmatpush1.bf16.msra.mxu0 %v275
    %286 = vmatprep.subr.bf16.mxu0 0
    %287 = vmatpush1.bf16.msra.mxu0 %v274
    %288 = vmatprep.subr.bf16.mxu0 0
    %289 = vmatpush1.bf16.msra.mxu0 %v273
    %290 = vmatprep.subr.bf16.mxu0 0
    %291 = vmatpush1.bf16.msra.mxu0 %v272
    %292 = vmatprep.subr.bf16.mxu0 0
    %293 = vmatpush1.bf16.msra.mxu0 %v271
    %294 = vmatprep.subr.bf16.mxu0 0
    %295 = vmatpush1.bf16.msra.mxu0 %v270
    %296 = vmatprep.subr.bf16.mxu0 0
    %297 = vmatpush1.bf16.msra.mxu0 %v269
    %298 = vmatprep.subr.bf16.mxu0 0
    %299 = vmatpush1.bf16.msra.mxu0 %v268
    %300 = vmatprep.subr.bf16.mxu0 0
    %301 = vmatpush2.bf16.msra.mxu0 0
    %302 = vmatprep.subr.bf16.mxu0 0
    %303 = vmatpush2.bf16.msra.mxu0 0
    %304 = vmatprep.subr.bf16.mxu0 0
    %305 = vmatpush2.bf16.msra.mxu0 0
    %306 = vmatprep.subr.bf16.mxu0 0
    %307 = vmatpush2.bf16.msra.mxu0 0
    %308 = vmatprep.subr.bf16.mxu0 0
    %309 = vmatpush2.bf16.msra.mxu0 0
    %310 = vmatprep.subr.bf16.mxu0 0
    %311 = vmatpush2.bf16.msra.mxu0 0
    %312 = vmatprep.subr.bf16.mxu0 0
    %313 = vmatpush2.bf16.msra.mxu0 0
    %314 = vmatprep.subr.bf16.mxu0 0
    %315 = vmatpush2.bf16.msra.mxu0 0
    %316 = vmatprep.mubr.bf16.mxu0 0
    %317 = vmatmul.mubr.bf16.gmra.mxu0 %v219
    %v318 = vpop.f32.mrf.mxu0
    %v319 = vadd.f32 0.0, %v318
    %v320 = vpop.f32.mrf.mxu0
    %v321 = vpop.f32.mrf.mxu0
    %v322 = vadd.f32 0.0, %v321
    %v323 = vpop.f32.mrf.mxu0
    %324 = vdwg.mxu0
    %v325 = vlaneseq
    %v326 = vand.u32 %v325, 127
    %vm327 = vcmp.lt.s32.totalorder %v326, 2
    %v328 = vsel %vm327, %v319, -1e+30
    %v329 = vsel %vm327, %v322, -1e+30
    %330 = vmax.xlane.f32.xlu0 %v328
    %v331 = vpop.xlane.xlu0 %330
    %332 = vmax.xlane.f32.xlu0 %v329
    %v333 = vpop.xlane.xlu0 %332
    %v334 = vsub.f32 %v328, %v331
    %v335 = vsub.f32 %v329, %v333
    %v336 = vmul.f32 %v334, 1.442695
    %v337 = vpow.pop %v336
    %v338 = vmul.f32 %v335, 1.442695
    %v339 = vpow.pop %v338
    %340 = vadd.xlane.f32.xlu0 %v337
    %v341 = vpop.xlane.xlu0 %340
    %342 = vadd.xlane.f32.xlu0 %v339
    %v343 = vpop.xlane.xlu0 %342
    %v344 = vlog2.pop %v341
    %v345 = vmul.f32 %v344, 0.6931472
    %v346 = vlog2.pop %v343
    %v347 = vmul.f32 %v346, 0.6931472
    %v348 = vsub.f32 %v334, %v345
    %v349 = vsub.f32 %v335, %v347
    %350 = vst [vmem:[%s5] sm:$0xff] %v348
    %351 = vst [vmem:[%s5 + $0x8] sm:$0xff] %v349
    %v352 = vld [vmem:[%s1] sm:$0xff]
    %v353 = vld [vmem:[%s1 + $0x8] sm:$0xff]
    %v354 = vadd.f32 %v348, %v352
    %v355 = vadd.f32 %v349, %v353
    %356 = vmax.xlane.f32.xlu0 %v354
    %v357 = vpop.xlane.xlu0 %356
    %358 = vmax.xlane.f32.xlu0 %v355
    %v359 = vpop.xlane.xlu0 %358
    %vm360 = vcmp.eq.f32.partialorder %v354, %v357
    %vm361 = vcmp.eq.f32.partialorder %v355, %v359
    %v362 = vsel %vm360, %v326, 128
    %v363 = vsel %vm361, %v326, 128
    %v364 = vand.u32 %v362, 65535
    %v365 = vshra.s32 %v362, 16
    %v366 = vcvt.s32.f32 %v364
    %v367 = vcvt.s32.f32 %v365
    %368 = vmin.xlane.f32.xlu0 %v367
    %v369 = vpop.xlane.xlu0 %368
    %vm370 = vcmp.eq.f32.partialorder %v367, %v369
    %v371 = vsel %vm370, %v366, inf
    %372 = vmin.xlane.f32.xlu0 %v371
    %v373 = vpop.xlane.xlu0 %372
    %v374 = vcvt.f32.s32 %v373
    %v375 = vcvt.f32.s32 %v369
    %v376 = vshll.u32 %v375, 16
    %v377 = vadd.s32 %v376, %v374
    %v378 = vand.u32 %v363, 65535
    %v379 = vshra.s32 %v363, 16
    %v380 = vcvt.s32.f32 %v378
    %v381 = vcvt.s32.f32 %v379
    %382 = vmin.xlane.f32.xlu0 %v381
    %v383 = vpop.xlane.xlu0 %382
    %vm384 = vcmp.eq.f32.partialorder %v381, %v383
    %v385 = vsel %vm384, %v380, inf
    %386 = vmin.xlane.f32.xlu0 %v385
    %v387 = vpop.xlane.xlu0 %386
    %v388 = vcvt.f32.s32 %v387
    %v389 = vcvt.f32.s32 %v383
    %v390 = vshll.u32 %v389, 16
    %v391 = vadd.s32 %v390, %v388
    %vm392 = vcmp.lt.s32.totalorder %v377, 1
    %v393 = vsel %vm392, %v377, 1
    %vm394 = vcmp.lt.s32.totalorder %v391, 1
    %v395 = vsel %vm394, %v391, 1
    %vm396 = vcmask 7168
    %397 = vst.msk [vmem:[%s6] sm:$0xff] %vm396, %v393
    %398 = vst.msk [vmem:[%s6 + $0x8] sm:$0xff] %vm396, %v395
    %vm399 = vcmp.ne.f32.partialorder %v348, %v348
    %vm400 = vcmp.ne.f32.partialorder %v349, %v349
    %v401 = vsel %vm399, 1, 0
    %v402 = vsel %vm400, 1, 0
    %vm403 = vcmp.gt.s32.totalorder %v401, %v402
    %v404 = vsel %vm403, %v401, %v402
    %v405 = vand.u32 %v404, 65535
    %v406 = vshra.s32 %v404, 16
    %v407 = vcvt.s32.f32 %v405
    %v408 = vcvt.s32.f32 %v406
    %409 = vmax.xlane.f32.xlu0 %v408
    %v410 = vpop.xlane.xlu0 %409
    %vm411 = vcmp.eq.f32.partialorder %v408, %v410
    %v412 = vsel %vm411, %v407, -inf
    %413 = vmax.xlane.f32.xlu0 %v412
    %v414 = vpop.xlane.xlu0 %413
    %v415 = vcvt.f32.s32 %v414
    %v416 = vcvt.f32.s32 %v410
    %v417 = vshll.u32 %v416, 16
    %v418 = vadd.s32 %v417, %v415
    %v419 = vrot.slane %v418, 4
    %vm420 = vcmp.gt.s32.totalorder %v418, %v419
    %v421 = vsel %vm420, %v418, %v419
    %v422 = vrot.slane %v421, 2
    %vm423 = vcmp.gt.s32.totalorder %v421, %v422
    %v424 = vsel %vm423, %v421, %v422
    %v425 = vrot.slane %v424, 1
    %vm426 = vcmp.gt.s32.totalorder %v424, %v425
    %v427 = vsel %vm426, %v424, %v425
    %s428 = vtos %v427
    %s429 = scalar_lea.smem [#allocation7], 0
    %430 = sst [smem:[%s429]] %s428
    // Predicated region
    $region30: #{policy_network_forward.1} parent=1 // pred_check
      _
    $region31: #{policy_network_forward.1} parent=1 // pred_check_branch
      %432 = sbr.rel (0) target = $region33
    $region32: #{policy_network_forward.1} parent=1 // pred_region
      _
    $region33: #{policy_network_forward.1} parent=1 // pred_fallthru
      _
    // Predicated region
    $region34: #{policy_network_forward.1} parent=1 // pred_check
      _
    $region35: #{policy_network_forward.1} parent=1 // pred_check_branch
      %434 = sbr.rel (0) target = $region37
    $region36: #{policy_network_forward.1} parent=1 // pred_region
      _
    $region37: #{policy_network_forward.1} parent=1 // pred_fallthru
      _
    // Predicated region
    $region38: #{policy_network_forward.1} parent=1 // pred_check
      _
    $region39: #{policy_network_forward.1} parent=1 // pred_check_branch
      %436 = sbr.rel (0) target = $region41
    $region40: #{policy_network_forward.1} parent=1 // pred_region
      %s438 = ssub.s32 16, 16
      %439 = vsyncadd [#allocation4], %s438
      %442 = dma.smem_to_hbm [#allocation7], 16, %s7, [#allocation4]
    $region41: #{policy_network_forward.1} parent=1 // pred_fallthru
      _
    // Predicated region
    $region42: #{policy_network_forward.1} parent=1 // pred_check
      _
    $region43: #{policy_network_forward.1} parent=1 // pred_check_branch
      %444 = sbr.rel (0) target = $region45
    $region44: #{policy_network_forward.1} parent=1 // pred_region
      _
    $region45: #{policy_network_forward.1} parent=1 // pred_fallthru
      _
    // Predicated region
    $region46: #{policy_network_forward.1} parent=1 // pred_check
      _
    $region47: #{policy_network_forward.1} parent=1 // pred_check_branch
      %446 = sbr.rel (0) target = $region49
    $region48: #{policy_network_forward.1} parent=1 // pred_region
      _
    $region49: #{policy_network_forward.1} parent=1 // pred_fallthru
      _
    // Predicated region
    $region50: #{policy_network_forward.1} parent=1 // pred_check
      _
    $region51: #{policy_network_forward.1} parent=1 // pred_check_branch
      %448 = sbr.rel (0) target = $region53
    $region52: #{policy_network_forward.1} parent=1 // pred_region
      %449 = dma.done [#allocation4], 16
    $region53: #{policy_network_forward.1} parent=1 // pred_fallthru
      _
    %450 = sfence
    %451 = vsyncpa [#allocation3], 1
    %452 = vsyncpa [#allocation6], 1
    %453 = vsyncpa [#allocation4], 1

</llo_original>
